<compile_context>
chip_gen: v6e
topology: v6e:2x2x1
jax: 0.10.0
libtpu: 0.0.40
codegen_flags: <defaults>
</compile_context>

<pallas_src>
import functools

import jax
import jax.numpy as jnp
from jax.experimental import pallas as pl
from jax.experimental.pallas import tpu as pltpu


def _choose_tile_n(n, max_tile=16384):
    """Largest lane-dense tile (multiple of 128) dividing n, capped at max_tile."""
    if n <= max_tile:
        return n
    if n % 128 == 0:
        t = (max_tile // 128) * 128
        while t >= 128:
            if n % t == 0:
                return t
            t -= 128
    return n  # fallback: single full-N block


def _project3d_kernel(p_ref, pts_ref, out_ref, *, eps):
    # p_ref:   (B, 12) f32 in SMEM   — rows 0..2 of P = K @ T, flattened.
    # pts_ref: (1, 4, TILE_N) in VMEM
    # out_ref: (1, 2, TILE_N) in VMEM
    b = pl.program_id(0)

    pts = pts_ref[0]                         # (4, T)
    x = pts[0:1, :]
    y = pts[1:2, :]
    z = pts[2:3, :]
    w = pts[3:4, :]

    def cam_row(r):
        # Broadcast FMAs on the VPU: scalar (from SMEM) * vector.
        return (p_ref[b, 4 * r + 0] * x
                + p_ref[b, 4 * r + 1] * y
                + p_ref[b, 4 * r + 2] * z
                + p_ref[b, 4 * r + 3] * w)

    cam_x = cam_row(0)                       # (1, T)
    cam_y = cam_row(1)                       # (1, T)
    cam_z = cam_row(2)                       # (1, T)

    # Exact reciprocal (approx=False) to stay within the reference tolerance.
    inv = pl.reciprocal(cam_z + eps, approx=False)   # (1, T)

    pix = jnp.concatenate([cam_x * inv, cam_y * inv], axis=0)   # (2, T)
    out_ref[0] = pix.astype(out_ref.dtype)


def project3d(points, K, T, *, batch_size, height, width, eps=1e-7, tile_n=None):
    """points: (B, 4, H*W) f32; K, T: (B, 4, 4) f32 -> (B, H, W, 2) f32."""
    B = batch_size
    N = height * width
    assert points.shape == (B, 4, N)
    assert K.shape == (B, 4, 4) and T.shape == (B, 4, 4)

    # Hoist P = (K @ T)[:, :3, :] out of the kernel (tiny batched 4x4 matmul)
    # and flatten so the kernel can read it as SMEM scalars.
    P = jnp.matmul(K, T)[:, :3, :].reshape(B, 12).astype(jnp.float32)

    tn = _choose_tile_n(N) if tile_n is None else tile_n
    assert N % tn == 0, f"tile {tn} must divide N={N}"

    kernel = functools.partial(_project3d_kernel, eps=eps)

    pix = pl.pallas_call(
        kernel,
        out_shape=jax.ShapeDtypeStruct((B, 2, N), points.dtype),
        grid_spec=pltpu.PrefetchScalarGridSpec(
            num_scalar_prefetch=0,
            grid=(B, N // tn),
            in_specs=[
                # P lives fully in SMEM (cheap scalar broadcasts in-kernel).
                pl.BlockSpec(memory_space=pltpu.MemorySpace.SMEM),
                pl.BlockSpec((1, 4, tn), lambda b, n: (b, 0, n)),
            ],
            out_specs=pl.BlockSpec((1, 2, tn), lambda b, n: (b, 0, n)),
        ),
        compiler_params=pltpu.CompilerParams(
            dimension_semantics=("parallel", "parallel"),
            vmem_limit_bytes=32 * 1024 * 1024,
        ),
    )(P, points)

    # Layout glue to match torch: view(B, 2, H, W) -> permute(0, 2, 3, 1).
    pix = pix.reshape(B, 2, height, width)
    return jnp.transpose(pix, (0, 2, 3, 1))


def _reference(points, K, T, *, batch_size, height, width, eps=1e-7):
    P = jnp.matmul(K, T)[:, :3, :]
    cam = jnp.matmul(P, points)
    pix = cam[:, :2, :] / (cam[:, 2:3, :] + eps)
    pix = pix.reshape(batch_size, 2, height, width)
    return jnp.transpose(pix, (0, 2, 3, 1))


if __name__ == "__main__":
    B, H, W = 2, 16, 16
    N = H * W
    key = jax.random.PRNGKey(0)
    k_xy, k_z, k_t = jax.random.split(key, 3)

    # Homogeneous 3D points: (x, y, z, 1), z > 0.
    xy = jax.random.normal(k_xy, (B, 2, N), dtype=jnp.float32)
    z = jax.random.uniform(k_z, (B, 1, N), dtype=jnp.float32,
                           minval=1.0, maxval=5.0)
    ones = jnp.ones((B, 1, N), dtype=jnp.float32)
    points = jnp.concatenate([xy, z, ones], axis=1)            # (B, 4, N)

    # Intrinsics-like K and a rigid-ish T (identity + small translation).
    fx, fy, cx, cy = 0.58 * W, 1.92 * H, 0.5 * W, 0.5 * H
    K_single = jnp.array(
        [[fx, 0.0, cx, 0.0],
         [0.0, fy, cy, 0.0],
         [0.0, 0.0, 1.0, 0.0],
         [0.0, 0.0, 0.0, 1.0]], dtype=jnp.float32)
    K = jnp.tile(K_single[None], (B, 1, 1))                    # (B, 4, 4)

    trans = 0.1 * jax.random.normal(k_t, (B, 3), dtype=jnp.float32)
    T = jnp.tile(jnp.eye(4, dtype=jnp.float32)[None], (B, 1, 1))
    T = T.at[:, :3, 3].set(trans)                              # (B, 4, 4)

    out = project3d(points, K, T, batch_size=B, height=H, width=W)
    out = jax.block_until_ready(out)

    ref = _reference(points, K, T, batch_size=B, height=H, width=W)
    assert out.shape == (B, H, W, 2)
    assert jnp.allclose(out, ref, atol=1e-4, rtol=1e-4)

    print("KERNEL_OK")
</pallas_src>

<mosaic_0001>
module attributes {stable_mosaic.version = 11 : i64} {
  func.func @_project3d_kernel(%arg0: i32, %arg1: i32, %arg2: memref<2x12xf32, #tpu.memory_space<smem>>, %arg3: memref<1x4x256xf32, #tpu.memory_space<vmem>>, %arg4: memref<1x2x256xf32, #tpu.memory_space<vmem>>) attributes {dimension_semantics = [#tpu.dimension_semantics<parallel>, #tpu.dimension_semantics<parallel>], iteration_bounds = array<i64: 2, 1>, scalar_prefetch = 0 : i64, scratch_operands = 0 : i64, tpu.core_type = #tpu.core_type<tc>, window_params = [{transform_indices = @transform_0, window_bounds = array<i64: 2, 12>}, {transform_indices = @transform_1, window_bounds = array<i64: 1, 4, 256>}, {transform_indices = @transform_2, window_bounds = array<i64: 1, 2, 256>}]} {
    %c0 = arith.constant 0 : index
    %c0_0 = arith.constant 0 : index
    %c0_1 = arith.constant 0 : index
    %0 = vector.load %arg3[%c0, %c0_0, %c0_1] : memref<1x4x256xf32, #tpu.memory_space<vmem>>, vector<1x4x256xf32>
    %1 = vector.shape_cast %0 : vector<1x4x256xf32> to vector<4x256xf32>
    %2 = vector.extract_strided_slice %1 {offsets = [0, 0], sizes = [1, 256], strides = [1, 1]} : vector<4x256xf32> to vector<1x256xf32>
    %3 = vector.extract_strided_slice %1 {offsets = [1, 0], sizes = [1, 256], strides = [1, 1]} : vector<4x256xf32> to vector<1x256xf32>
    %4 = vector.extract_strided_slice %1 {offsets = [2, 0], sizes = [1, 256], strides = [1, 1]} : vector<4x256xf32> to vector<1x256xf32>
    %5 = vector.extract_strided_slice %1 {offsets = [3, 0], sizes = [1, 256], strides = [1, 1]} : vector<4x256xf32> to vector<1x256xf32>
    %6 = arith.index_cast %arg0 : i32 to index
    %c0_2 = arith.constant 0 : index
    %7 = memref.load %arg2[%6, %c0_2] : memref<2x12xf32, #tpu.memory_space<smem>>
    %8 = vector.broadcast %7 : f32 to vector<1x256xf32>
    %9 = arith.mulf %8, %2 : vector<1x256xf32>
    %10 = arith.index_cast %arg0 : i32 to index
    %c1 = arith.constant 1 : index
    %11 = memref.load %arg2[%10, %c1] : memref<2x12xf32, #tpu.memory_space<smem>>
    %12 = vector.broadcast %11 : f32 to vector<1x256xf32>
    %13 = arith.mulf %12, %3 : vector<1x256xf32>
    %14 = arith.addf %9, %13 : vector<1x256xf32>
    %15 = arith.index_cast %arg0 : i32 to index
    %c2 = arith.constant 2 : index
    %16 = memref.load %arg2[%15, %c2] : memref<2x12xf32, #tpu.memory_space<smem>>
    %17 = vector.broadcast %16 : f32 to vector<1x256xf32>
    %18 = arith.mulf %17, %4 : vector<1x256xf32>
    %19 = arith.addf %14, %18 : vector<1x256xf32>
    %20 = arith.index_cast %arg0 : i32 to index
    %c3 = arith.constant 3 : index
    %21 = memref.load %arg2[%20, %c3] : memref<2x12xf32, #tpu.memory_space<smem>>
    %22 = vector.broadcast %21 : f32 to vector<1x256xf32>
    %23 = arith.mulf %22, %5 : vector<1x256xf32>
    %24 = arith.addf %19, %23 : vector<1x256xf32>
    %25 = arith.index_cast %arg0 : i32 to index
    %c4 = arith.constant 4 : index
    %26 = memref.load %arg2[%25, %c4] : memref<2x12xf32, #tpu.memory_space<smem>>
    %27 = vector.broadcast %26 : f32 to vector<1x256xf32>
    %28 = arith.mulf %27, %2 : vector<1x256xf32>
    %29 = arith.index_cast %arg0 : i32 to index
    %c5 = arith.constant 5 : index
    %30 = memref.load %arg2[%29, %c5] : memref<2x12xf32, #tpu.memory_space<smem>>
    %31 = vector.broadcast %30 : f32 to vector<1x256xf32>
    %32 = arith.mulf %31, %3 : vector<1x256xf32>
    %33 = arith.addf %28, %32 : vector<1x256xf32>
    %34 = arith.index_cast %arg0 : i32 to index
    %c6 = arith.constant 6 : index
    %35 = memref.load %arg2[%34, %c6] : memref<2x12xf32, #tpu.memory_space<smem>>
    %36 = vector.broadcast %35 : f32 to vector<1x256xf32>
    %37 = arith.mulf %36, %4 : vector<1x256xf32>
    %38 = arith.addf %33, %37 : vector<1x256xf32>
    %39 = arith.index_cast %arg0 : i32 to index
    %c7 = arith.constant 7 : index
    %40 = memref.load %arg2[%39, %c7] : memref<2x12xf32, #tpu.memory_space<smem>>
    %41 = vector.broadcast %40 : f32 to vector<1x256xf32>
    %42 = arith.mulf %41, %5 : vector<1x256xf32>
    %43 = arith.addf %38, %42 : vector<1x256xf32>
    %44 = arith.index_cast %arg0 : i32 to index
    %c8 = arith.constant 8 : index
    %45 = memref.load %arg2[%44, %c8] : memref<2x12xf32, #tpu.memory_space<smem>>
    %46 = vector.broadcast %45 : f32 to vector<1x256xf32>
    %47 = arith.mulf %46, %2 : vector<1x256xf32>
    %48 = arith.index_cast %arg0 : i32 to index
    %c9 = arith.constant 9 : index
    %49 = memref.load %arg2[%48, %c9] : memref<2x12xf32, #tpu.memory_space<smem>>
    %50 = vector.broadcast %49 : f32 to vector<1x256xf32>
    %51 = arith.mulf %50, %3 : vector<1x256xf32>
    %52 = arith.addf %47, %51 : vector<1x256xf32>
    %53 = arith.index_cast %arg0 : i32 to index
    %c10 = arith.constant 10 : index
    %54 = memref.load %arg2[%53, %c10] : memref<2x12xf32, #tpu.memory_space<smem>>
    %55 = vector.broadcast %54 : f32 to vector<1x256xf32>
    %56 = arith.mulf %55, %4 : vector<1x256xf32>
    %57 = arith.addf %52, %56 : vector<1x256xf32>
    %58 = arith.index_cast %arg0 : i32 to index
    %c11 = arith.constant 11 : index
    %59 = memref.load %arg2[%58, %c11] : memref<2x12xf32, #tpu.memory_space<smem>>
    %60 = vector.broadcast %59 : f32 to vector<1x256xf32>
    %61 = arith.mulf %60, %5 : vector<1x256xf32>
    %62 = arith.addf %57, %61 : vector<1x256xf32>
    %cst = arith.constant 1.000000e-07 : f32
    %63 = vector.broadcast %cst : f32 to vector<1x256xf32>
    %64 = arith.addf %62, %63 : vector<1x256xf32>
    %65 = tpu.reciprocal %64 : vector<1x256xf32> -> vector<1x256xf32>
    %66 = arith.mulf %24, %65 : vector<1x256xf32>
    %67 = arith.mulf %43, %65 : vector<1x256xf32>
    %68 = tpu.concatenate %66, %67 in 0 : vector<1x256xf32>, vector<1x256xf32> -> vector<2x256xf32>
    %c0_3 = arith.constant 0 : index
    %c0_4 = arith.constant 0 : index
    %c0_5 = arith.constant 0 : index
    %69 = vector.load %arg4[%c0_3, %c0_4, %c0_5] : memref<1x2x256xf32, #tpu.memory_space<vmem>>, vector<1x2x256xf32>
    %70 = vector.shape_cast %69 : vector<1x2x256xf32> to vector<2x256xf32>
    %71 = vector.shape_cast %68 : vector<2x256xf32> to vector<1x2x256xf32>
    tpu.vector_store %arg4[%c0_3, %c0_4, %c0_5], %71 {strides = array<i32>} : memref<1x2x256xf32, #tpu.memory_space<vmem>>, vector<1x2x256xf32>,
    return
  }
  func.func @transform_0(%arg0: i32, %arg1: i32) -> (i32, i32) {
    %c0_i32 = arith.constant 0 : i32
    %c0_i32_0 = arith.constant 0 : i32
    %c0_i32_1 = arith.constant 0 : i32
    return %c0_i32, %c0_i32_0 : i32, i32
  }
  func.func @transform_1(%arg0: i32, %arg1: i32) -> (i32, i32, i32) {
    %c0_i32 = arith.constant 0 : i32
    %c0_i32_0 = arith.constant 0 : i32
    return %arg0, %c0_i32, %arg1 : i32, i32, i32
  }
  func.func @transform_2(%arg0: i32, %arg1: i32) -> (i32, i32, i32) {
    %c0_i32 = arith.constant 0 : i32
    %c0_i32_0 = arith.constant 0 : i32
    return %arg0, %c0_i32, %arg1 : i32, i32, i32
  }
}

</mosaic_0001>

<llo_original>
// kernel: tpu_custom_call.1
$region0: #{tpu_custom_call.1}
  #allocation0 [shape = 'u32[]', space=smem, size = 0x4, offset = 0x4, fixed_abs, tag = 'smem constant byte address 0x4 - core index']
  #allocation1 [shape = 'u32[144,128]{1,0:T(1,128)}', space=vmem, size = 0x12000, scoped, tag = 'internal scratch']
  %s0 = inlined_call_operand.hbm [shape: f32[2,12], index: 0, kind: input, shape index: {}]
  %s1 = inlined_call_operand.hbm [shape: f32[2,4,256], index: 1, kind: input, shape index: {}]
  %s2 = inlined_call_operand.hbm [shape: f32[2,2,256], index: 2, kind: output, shape index: {}]
  %s3 = sld [smem:[#allocation0]]
  $region49: #{tpu_custom_call.1} parent=0
    _
  %s5 = ssub.s32 1, %s3
  %s6 = scalar_select 0, %s5, %s3
  $region1: #{tpu_custom_call.1} parent=0
    #allocation2 [shape = 'u8[1024]{0}', space=smem, size = 0x400, scoped, tag = 'input window, operand 0, single buffered']
    #allocation3 [shape = 's32[2]{0}', space=sflag, size = 0x8, scoped, tag = 'scoped memory for tpu_custom_call.1']
    #allocation4 [shape = 's32[2]{0}', space=sflag, size = 0x8, scoped, tag = 'scoped memory for tpu_custom_call.1']
    #allocation5 [shape = 's32[2]{0}', space=sflag, size = 0x8, scoped, tag = 'scoped memory for tpu_custom_call.1']
    #allocation6 [shape = 'u8[8192]{0}', space=vmem, size = 0x2000, scoped, tag = 'input window, operand 1']
    #allocation7 [shape = 'u8[4096]{0}', space=vmem, size = 0x1000, scoped, tag = 'output window, operand 0']
    %7 = vsyncpa [#allocation5], 0
    %8 = vsyncpa [#allocation3], 0
    %s9 = scalar_lea.sflag [#allocation3], 1
    %10 = vsyncpa %s9, 0
    %11 = vsyncpa [#allocation4], 0
    %s12 = scalar_lea.sflag [#allocation4], 1
    %13 = vsyncpa %s12, 0
    loop: start=0, step=1, limit=4
    $region2: #{tpu_custom_call.1} parent=1 // loop_pre_header
      _
    $region3: #{tpu_custom_call.1} parent=1 // loop_header
      %s15 = sphi 0, %s19
      %p16 = scmp.ge.s32.totalorder %s15, 4
      %s22 = sphi 0, %s34
      %s23 = sphi 0, %s30
      %s24 = sphi 0, %s22
      %s25 = sphi 0, %s23
      %s26 = sphi 0, %s24
      %s27 = sphi 0, %s25
      %s35 = sphi 0, %s35
      %s37 = sphi 0, %s35
      %s38 = sphi 0, %s37
      %s52 = sphi 0, %s38
      %s60 = sphi 0, %s62
      %s63 = sphi 0, %s60
      %s64 = sphi 0, %s63
      %s80 = sphi 0, %s64
      %s88 = sphi 0, %s90
      %s91 = sphi 0, %s88
      %s92 = sphi 0, %s91
      %s108 = sphi 0, %s92
    $region4: #{tpu_custom_call.1} parent=1 // loop_header_branch
      %18 = sbr.rel (%p16) target = $region8
    $region5: #{tpu_custom_call.1} parent=1 // loop_body
      %s20 = ssub.s32 %s15, 1
      %s21 = ssub.s32 %s15, 2
      %s28 = sadd.s32 1, %s23
      %p29 = scmp.ge.s32.totalorder %s28, 1
      %s30 = scalar_select %p29, 0, %s28
      %s31 = sadd.s32 1, %s22
      %s32 = scalar_select %p29, %s31, %s22
      %p33 = scmp.ge.s32.totalorder %s32, 2
      %s34 = scalar_select %p33, 0, %s32
      %s36 = sadd.s32 %s35, 1
      %p39 = scmp.eq.s32.totalorder %s15, 1
      %p40 = scmp.ne.s32.totalorder %s35, %s37
      %p41 = scmp.eq.s32.totalorder %s15, 0
      %p42 = por %p40, %p41
      %p43 = scmp.ne.s32.totalorder %s35, %s37
      %p44 = scmp.eq.s32.totalorder %s20, 1
      %p45 = por %p43, %p44
      %p46 = scmp.ne.s32.totalorder %s37, %s38
      %p47 = scmp.eq.s32.totalorder %s20, 0
      %p48 = por %p46, %p47
      %p49 = scmp.ne.s32.totalorder %s37, %s38
      %p50 = scmp.eq.s32.totalorder %s21, 1
      %p51 = por %p49, %p50
      %p53 = scmp.ne.s32.totalorder %s38, %s52
      %p54 = scmp.eq.s32.totalorder %s21, 0
      %p55 = por %p53, %p54
      %s56 = ssub.s32 %s22, %s34
      %s57 = ssub.s32 %s23, %s30
      %s58 = sor.u32 %s56, %s57
      %p59 = scmp.eq.s32.totalorder %s58, 0
      %s61 = sadd.s32 %s60, 1
      %s62 = scalar_select %p59, %s60, %s61
      %p65 = pneg %p59
      %p66 = scmp.eq.s32.totalorder %s15, 1
      %p67 = por %p65, %p66
      %p68 = scmp.ne.s32.totalorder %s60, %s63
      %p69 = scmp.eq.s32.totalorder %s15, 0
      %p70 = por %p68, %p69
      %p71 = scmp.ne.s32.totalorder %s60, %s63
      %p72 = scmp.eq.s32.totalorder %s20, 1
      %p73 = por %p71, %p72
      %p74 = scmp.ne.s32.totalorder %s63, %s64
      %p75 = scmp.eq.s32.totalorder %s20, 0
      %p76 = por %p74, %p75
      %p77 = scmp.ne.s32.totalorder %s63, %s64
      %p78 = scmp.eq.s32.totalorder %s21, 1
      %p79 = por %p77, %p78
      %p81 = scmp.ne.s32.totalorder %s64, %s80
      %p82 = scmp.eq.s32.totalorder %s21, 0
      %p83 = por %p81, %p82
      %s84 = ssub.s32 %s22, %s34
      %s85 = ssub.s32 %s23, %s30
      %s86 = sor.u32 %s84, %s85
      %p87 = scmp.eq.s32.totalorder %s86, 0
      %s89 = sadd.s32 %s88, 1
      %s90 = scalar_select %p87, %s88, %s89
      %p93 = pneg %p87
      %p94 = scmp.eq.s32.totalorder %s15, 1
      %p95 = por %p93, %p94
      %p96 = scmp.ne.s32.totalorder %s88, %s91
      %p97 = scmp.eq.s32.totalorder %s15, 0
      %p98 = por %p96, %p97
      %p99 = scmp.ne.s32.totalorder %s88, %s91
      %p100 = scmp.eq.s32.totalorder %s20, 1
      %p101 = por %p99, %p100
      %p102 = scmp.ne.s32.totalorder %s91, %s92
      %p103 = scmp.eq.s32.totalorder %s20, 0
      %p104 = por %p102, %p103
      %p105 = scmp.ne.s32.totalorder %s91, %s92
      %p106 = scmp.eq.s32.totalorder %s21, 1
      %p107 = por %p105, %p106
      %p109 = scmp.ne.s32.totalorder %s92, %s108
      %p110 = scmp.eq.s32.totalorder %s21, 0
      %p111 = por %p109, %p110
      %p112 = scmp.le.s32.totalorder 1, %s15
      %p113 = scmp.lt.s32.totalorder %s15, 3
      %p114 = pnand %p112, %p113
      %p115 = pneg %p114
      // Predicated region
      $region9: #{tpu_custom_call.1} parent=5 // pred_check
        _
      $region10: #{tpu_custom_call.1} parent=5 // pred_check_branch
        %117 = sbr.rel (%p114) target = $region12
      $region11: #{tpu_custom_call.1} parent=5 // pred_region
        %s118 = ssub.s32 %s15, 1
        // Predicated region
        $region13: #{tpu_custom_call.1} parent=11 // pred_check
          %p119 = pneg %p48
        $region14: #{tpu_custom_call.1} parent=11 // pred_check_branch
          %121 = sbr.rel (%p119) target = $region16
        $region15: #{tpu_custom_call.1} parent=11 // pred_region
          %s123 = ssub.s32 32, 32
          %124 = vsyncadd [#allocation5], %s123
          %127 = dma.hbm_to_smem %s0, 32, [#allocation2], [#allocation5]
        $region16: #{tpu_custom_call.1} parent=11 // pred_fallthru
          _
      $region12: #{tpu_custom_call.1} parent=5 // pred_fallthru
        _
      %p128 = scmp.lt.s32.totalorder %s15, 2
      // Predicated region
      $region17: #{tpu_custom_call.1} parent=5 // pred_check
        %p129 = pneg %p128
      $region18: #{tpu_custom_call.1} parent=5 // pred_check_branch
        %131 = sbr.rel (%p129) target = $region20
      $region19: #{tpu_custom_call.1} parent=5 // pred_region
        // Predicated region
        $region21: #{tpu_custom_call.1} parent=19 // pred_check
          %p132 = pneg %p70
        $region22: #{tpu_custom_call.1} parent=19 // pred_check_branch
          %134 = sbr.rel (%p132) target = $region24
        $region23: #{tpu_custom_call.1} parent=19 // pred_region
          %s135 = sand.u32 %s60, 1
          %s136 = scalar_lea.sflag [#allocation3], %s135
          %s137 = sand.u32 %s60, 1
          %s138 = smul.addr %s137, 8
          %s139 = scalar_lea.vmem [#allocation6], %s138
          %s140 = smul.u32 2, %s23
          %s142 = ssub.s32 128, 128
          %143 = vsyncadd %s136, %s142
          %s144 = smul.addr %s22, 2
          %s145 = sadd.s32 %s140, %s144
          %s146 = smul.addr %s145, 64
          %s147 = scalar_lea.hbm %s1, %s146
          %s149 = sshll.u32 %s139, 4
          %s150 = int_to_ptr.vmem [resolvable:$true] %s149
          %152 = dma.hbm_to_vmem [thread:$0]  %s147, 128, %s150, %s136
        $region24: #{tpu_custom_call.1} parent=19 // pred_fallthru
          _
      $region20: #{tpu_custom_call.1} parent=5 // pred_fallthru
        _
      %p153 = scmp.le.s32.totalorder 1, %s15
      %p154 = scmp.lt.s32.totalorder %s15, 3
      %p155 = pnand %p153, %p154
      %p156 = pneg %p155
      // Predicated region
      $region25: #{tpu_custom_call.1} parent=5 // pred_check
        _
      $region26: #{tpu_custom_call.1} parent=5 // pred_check_branch
        %158 = sbr.rel (%p155) target = $region28
      $region27: #{tpu_custom_call.1} parent=5 // pred_region
        %s159 = ssub.s32 %s15, 1
        // Predicated region
        $region29: #{tpu_custom_call.1} parent=27 // pred_check
          %p160 = pneg %p48
        $region30: #{tpu_custom_call.1} parent=27 // pred_check_branch
          %162 = sbr.rel (%p160) target = $region32
        $region31: #{tpu_custom_call.1} parent=27 // pred_region
          %163 = dma.done [#allocation5], 32
        $region32: #{tpu_custom_call.1} parent=27 // pred_fallthru
          _
        %s164 = sand.u32 %s63, 1
        %s165 = scalar_lea.sflag [#allocation3], %s164
        %s166 = sand.u32 %s63, 1
        %s167 = smul.addr %s166, 8
        %s168 = scalar_lea.vmem [#allocation6], %s167
        // Predicated region
        $region33: #{tpu_custom_call.1} parent=27 // pred_check
          %p169 = pneg %p76
        $region34: #{tpu_custom_call.1} parent=27 // pred_check_branch
          %171 = sbr.rel (%p169) target = $region36
        $region35: #{tpu_custom_call.1} parent=27 // pred_region
          %172 = dma.done %s165, 128
        $region36: #{tpu_custom_call.1} parent=27 // pred_fallthru
          _
        %173 = sfence
        %p174 = pneg %p48
        %p175 = pneg %p45
        %s176 = sand.u32 %s63, 1
        %s177 = scalar_lea.sflag [#allocation3], %s176
        %s178 = sand.u32 %s63, 1
        %s179 = smul.addr %s178, 8
        %s180 = scalar_lea.vmem [#allocation6], %s179
        %p181 = pneg %p76
        %p182 = pneg %p73
        %p183 = pneg %p104
        %p184 = pneg %p101
        %s185 = sand.u32 %s91, 1
        %s186 = scalar_lea.sflag [#allocation4], %s185
        %s187 = sand.u32 %s91, 1
        %s188 = smul.addr %s187, 4
        %s189 = scalar_lea.vmem [#allocation7], %s188
        %s190 = smul.u32 2, %s25
        %s191 = smul.u32 2, %s25
        %v192 = vld [vmem:[%s168] sm:$0xff]
        %s193 = smul.u32 %s24, 128
        %s194 = sld [smem:[#allocation2 + %s193]]
        %v195 = vstv %s194
        %v196 = vmul.f32 %v195, %v192
        %s197 = sadd.s32 %s193, 1
        %s198 = sld [smem:[#allocation2 + %s197]]
        %v199 = vstv %s198
        %v200 = vmul.f32 %v199, %v192
        %v202 = vrot.slane %v200, 5
        %v203 = vrot.slane %v202, 4
        %v205 = vadd.f32 %v196, %v203
        %s206 = sadd.s32 %s193, 2
        %s207 = sld [smem:[#allocation2 + %s206]]
        %v208 = vstv %s207
        %v209 = vmul.f32 %v208, %v192
        %v211 = vrot.slane %v209, 6
        %v212 = vrot.slane %v211, 4
        %v214 = vadd.f32 %v205, %v212
        %s215 = sadd.s32 %s193, 3
        %s216 = sld [smem:[#allocation2 + %s215]]
        %v217 = vstv %s216
        %v218 = vmul.f32 %v217, %v192
        %v220 = vrot.slane %v218, 7
        %v221 = vrot.slane %v220, 4
        %v223 = vadd.f32 %v214, %v221
        %s224 = sadd.s32 %s193, 4
        %s225 = sld [smem:[#allocation2 + %s224]]
        %v226 = vstv %s225
        %v227 = vmul.f32 %v226, %v192
        %s228 = sadd.s32 %s193, 5
        %s229 = sld [smem:[#allocation2 + %s228]]
        %v230 = vstv %s229
        %v231 = vmul.f32 %v230, %v192
        %v233 = vrot.slane %v231, 5
        %v234 = vrot.slane %v233, 4
        %v236 = vadd.f32 %v227, %v234
        %s237 = sadd.s32 %s193, 6
        %s238 = sld [smem:[#allocation2 + %s237]]
        %v239 = vstv %s238
        %v240 = vmul.f32 %v239, %v192
        %v242 = vrot.slane %v240, 6
        %v243 = vrot.slane %v242, 4
        %v245 = vadd.f32 %v236, %v243
        %s246 = sadd.s32 %s193, 7
        %s247 = sld [smem:[#allocation2 + %s246]]
        %v248 = vstv %s247
        %v249 = vmul.f32 %v248, %v192
        %v251 = vrot.slane %v249, 7
        %v252 = vrot.slane %v251, 4
        %v254 = vadd.f32 %v245, %v252
        %s255 = sadd.s32 %s193, 8
        %s256 = sld [smem:[#allocation2 + %s255]]
        %v257 = vstv %s256
        %v258 = vmul.f32 %v257, %v192
        %s259 = sadd.s32 %s193, 9
        %s260 = sld [smem:[#allocation2 + %s259]]
        %v261 = vstv %s260
        %v262 = vmul.f32 %v261, %v192
        %v264 = vrot.slane %v262, 5
        %v265 = vrot.slane %v264, 4
        %v267 = vadd.f32 %v258, %v265
        %s268 = sadd.s32 %s193, 10
        %s269 = sld [smem:[#allocation2 + %s268]]
        %v270 = vstv %s269
        %v271 = vmul.f32 %v270, %v192
        %v273 = vrot.slane %v271, 6
        %v274 = vrot.slane %v273, 4
        %v276 = vadd.f32 %v267, %v274
        %s277 = sadd.s32 %s193, 11
        %s278 = sld [smem:[#allocation2 + %s277]]
        %v279 = vstv %s278
        %v280 = vmul.f32 %v279, %v192
        %v282 = vrot.slane %v280, 7
        %v283 = vrot.slane %v282, 4
        %v285 = vadd.f32 %v276, %v283
        %v286 = vadd.f32 %v285, 1e-07
        %v287 = vrcp.pop %v286
        %v288 = vmul.f32 %v223, %v287
        %v289 = vmul.f32 %v254, %v287
        %v291 = vlaneseq
        %v292 = vshrl.u32 %v291, 7
        %v293 = vsub.s32 0, %v292
        %v294 = vrot.slane %v288, %v293
        %v295 = vlaneseq
        %v296 = vshrl.u32 %v295, 7
        %v297 = vsub.s32 4, %v296
        %v298 = vrot.slane %v288, %v297
        %v302 = vlaneseq
        %v303 = vshrl.u32 %v302, 7
        %v304 = vsub.s32 0, %v303
        %v305 = vrot.slane %v289, %v304
        %v306 = vlaneseq
        %v307 = vshrl.u32 %v306, 7
        %v308 = vsub.s32 4, %v307
        %v309 = vrot.slane %v289, %v308
        %vm312 = vcmask 1040384
        %v313 = vsel %vm312, %v294, %v305
        %v314 = vsel %vm312, %v298, %v309
        %v317 = vcombine.low %v313, %v314
        %v319 = vunpack.c.l.s4 1983009808
        %v320 = vunpack.c.0.s8 %v319
        %v321 = vlaneseq
        %v322 = vshrl.u32 %v321, 7
        %v323 = vsub.s32 %v320, %v322
        %v324 = vrot.slane %v317, %v323
        %326 = vst [vmem:[%s189] sm:$0xf] %v324
        %s327 = sand.u32 %s91, 1
        %s328 = scalar_lea.sflag [#allocation4], %s327
        %s329 = sand.u32 %s91, 1
        %s330 = smul.addr %s329, 4
        %s331 = scalar_lea.vmem [#allocation7], %s330
        // Predicated region
        $region37: #{tpu_custom_call.1} parent=27 // pred_check
          %p332 = pneg %p101
        $region38: #{tpu_custom_call.1} parent=27 // pred_check_branch
          %334 = sbr.rel (%p332) target = $region40
        $region39: #{tpu_custom_call.1} parent=27 // pred_region
          %s335 = smul.u32 2, %s25
          %s337 = ssub.s32 64, 64
          %338 = vsyncadd %s328, %s337
          %s339 = smul.addr %s24, 2
          %s340 = sadd.s32 %s335, %s339
          %s341 = smul.addr %s340, 32
          %s342 = scalar_lea.hbm %s2, %s341
          %s344 = sshll.u32 %s331, 4
          %s345 = int_to_ptr.vmem [resolvable:$true] %s344
          %347 = dma.vmem_to_hbm [thread:$0]  %s345, 64, %s342, %s328
        $region40: #{tpu_custom_call.1} parent=27 // pred_fallthru
          _
      $region28: #{tpu_custom_call.1} parent=5 // pred_fallthru
        _
      %p348 = scmp.le.s32.totalorder 2, %s15
      // Predicated region
      $region41: #{tpu_custom_call.1} parent=5 // pred_check
        %p349 = pneg %p348
      $region42: #{tpu_custom_call.1} parent=5 // pred_check_branch
        %351 = sbr.rel (%p349) target = $region44
      $region43: #{tpu_custom_call.1} parent=5 // pred_region
        %s352 = ssub.s32 %s15, 2
        // Predicated region
        $region45: #{tpu_custom_call.1} parent=43 // pred_check
          %p353 = pneg %p107
        $region46: #{tpu_custom_call.1} parent=43 // pred_check_branch
          %355 = sbr.rel (%p353) target = $region48
        $region47: #{tpu_custom_call.1} parent=43 // pred_region
          %s356 = sand.u32 %s92, 1
          %s357 = scalar_lea.sflag [#allocation4], %s356
          %s358 = sand.u32 %s92, 1
          %s359 = smul.addr %s358, 4
          %s360 = scalar_lea.vmem [#allocation7], %s359
          %361 = dma.done %s357, 64
        $region48: #{tpu_custom_call.1} parent=43 // pred_fallthru
          _
      $region44: #{tpu_custom_call.1} parent=5 // pred_fallthru
        _
    $region6: #{tpu_custom_call.1} parent=1 // loop_footer
      %s19 = sadd.s32 1, %s15
    $region7: #{tpu_custom_call.1} parent=1 // loop_footer_branch
      %14 = sbr.rel target = $region3
    $region8: #{tpu_custom_call.1} parent=1 // loop_exit
      _
    %362 = vsyncpa [#allocation3], 1
    %s363 = scalar_lea.sflag [#allocation3], 1
    %364 = vsyncpa %s363, 1
    %365 = vsyncpa [#allocation4], 1
    %s366 = scalar_lea.sflag [#allocation4], 1
    %367 = vsyncpa %s366, 1
    %368 = vsyncpa [#allocation5], 1
    %s369 = scalar_lea.sflag [#allocation5], 1
    %370 = vsyncpa %s369, 1

</llo_original>
